<compile_context>
chip_gen: v6e
topology: v6e:2x2x1
jax: 0.10.0
libtpu: 0.0.40
codegen_flags: <defaults>
</compile_context>

<pallas_src>
import functools

import jax
import jax.numpy as jnp
from jax.experimental import pallas as pl
from jax.experimental.pallas import tpu as pltpu


def _l2_normalize(x, eps=1e-12):
    # Matches torch.nn.functional.normalize(p=2, dim=1): x / max(||x||_2, eps)
    # via a single EUP rsqrt: clamp the squared norm at eps^2 (monotone sqrt
    # => identical result).  Also keeps padded garbage rows of a partial batch
    # tile finite (no 0/0), so they can be safely discarded on writeback.
    sumsq = jnp.sum(x * x, axis=1, keepdims=True)
    return x * jax.lax.rsqrt(jnp.maximum(sumsq, eps * eps))


def saga_kernel(asv_ref, cm_ref, w_ref, sb_ref, out_ref, *, C, H, compute_dtype):
    """One fused forward pass over a (TB, :) batch tile.

    w_ref is the packed f32 parameter buffer (resident across grid steps):
        rows [0, C)            cm_fc1_w @ Wa.T            (cols 0:C)
        rows [C, 2C)           cm_fc2_w @ Wa.T            (cols 0:C)
        rows [2C, 3C)          cm_fc3_w                   (cols 0:C)
        rows [3C, 3C+H)        asv_fc1_w                  (cols 0:H)
        rows [3C+H, 3C+2H)     asv_fc2_w                  (cols 0:H)
        row  rv+0 .. rv+2      cm_fc1_b@Wa.T, cm_fc2_b@Wa.T, cm_fc3_b  (0:C)
        row  rv+3              cm_score_w (as a row)      (cols 0:C)
        row  rv+4 .. rv+5      asv_fc1_b, asv_fc2_b       (cols 0:H)
        row  rv+6              out_w (as a row)           (cols 0:H)

    sb_ref is a (2,) f32 SMEM array: [cm_score_b, out_b].
    """
    f32 = jnp.float32
    cd = compute_dtype
    rv = 3 * C + 2 * H

    # MXU operands in compute_dtype (bf16 by default); everything else f32.
    cm = cm_ref[...].astype(cd)
    asv = asv_ref[...].astype(cd)

    # Static slices of the packed weight buffer (views -> load -> cheap cast).
    w1 = w_ref[0:C, 0:C].astype(cd)
    w2 = w_ref[C:2 * C, 0:C].astype(cd)
    w3 = w_ref[2 * C:3 * C, 0:C].astype(cd)
    aw1 = w_ref[3 * C:3 * C + H, 0:H].astype(cd)
    aw2 = w_ref[3 * C + H:3 * C + 2 * H, 0:H].astype(cd)

    b1 = w_ref[rv + 0:rv + 1, 0:C]            # (1, C)  f32
    b2 = w_ref[rv + 1:rv + 2, 0:C]
    b3 = w_ref[rv + 2:rv + 3, 0:C]
    score_w = w_ref[rv + 3:rv + 4, 0:C]       # (1, C)  f32
    ab1 = w_ref[rv + 4:rv + 5, 0:H]
    ab2 = w_ref[rv + 5:rv + 6, 0:H]
    out_w = w_ref[rv + 6:rv + 7, 0:H]         # (1, H)  f32

    score_b = sb_ref[0]                       # scalar f32 from SMEM
    out_b = sb_ref[1]

    # --- CM branch (SReLU's Wa already folded into w1/b1 and w2/b2) ---
    x = jnp.maximum(jnp.dot(cm, w1, preferred_element_type=f32) + b1, 0.0)
    x = jnp.maximum(jnp.dot(x.astype(cd), w2, preferred_element_type=f32) + b2, 0.0)
    x = jnp.dot(x.astype(cd), w3, preferred_element_type=f32) + b3
    x = _l2_normalize(x)                                  # LengthNorm (f32)
    # C -> 1 projection on VPU + XLU lane reduction (skip the MXU), f32.
    cm_score = jnp.sum(x * score_w, axis=1, keepdims=True) + score_b

    # --- ASV branch with score-aware gate ---
    r = jnp.maximum(jnp.dot(asv, aw1, preferred_element_type=f32) + ab1, 0.0)
    r = _l2_normalize(r)                                  # LengthNorm (f32)
    r = jax.nn.sigmoid(cm_score) * r                      # gate broadcast (f32)
    r = jnp.maximum(jnp.dot(r.astype(cd), aw2, preferred_element_type=f32) + ab2, 0.0)
    x_pred = jnp.sum(r * out_w, axis=1, keepdims=True) + out_b

    # Single merged store: col 0 = x_pred, col 1 = cm_score.
    out_ref[...] = jnp.concatenate([x_pred, cm_score], axis=1).astype(out_ref.dtype)


def init_params(key, asv_embed_dim, cm_embed_dim):
    """Deterministic synthetic parameters. PyTorch Linear W is (out,in); we store
    the transposed (in,out) form so the math is x @ W + b."""
    hidden = 2 * asv_embed_dim
    C = cm_embed_dim
    ks = jax.random.split(key, 16)

    def w(k, i, o, scale=0.1):
        return (scale * jax.random.normal(k, (i, o))).astype(jnp.float32)

    def b(k, o, scale=0.01):
        return (scale * jax.random.normal(k, (1, o))).astype(jnp.float32)

    # Wa init in the module is identity; add a small perturbation so the
    # offline fold is actually exercised by the correctness check.
    wa = (jnp.eye(C) + 0.05 * jax.random.normal(ks[14], (C, C))).astype(jnp.float32)

    return dict(
        cm_fc1_w=w(ks[0], C, C), cm_fc1_b=b(ks[1], C),
        cm_fc2_w=w(ks[2], C, C), cm_fc2_b=b(ks[3], C),
        cm_fc3_w=w(ks[4], C, C), cm_fc3_b=b(ks[5], C),
        wa=wa,
        cm_score_w=w(ks[6], C, 1), cm_score_b=b(ks[7], 1),
        asv_fc1_w=w(ks[8], hidden, hidden), asv_fc1_b=b(ks[9], hidden),
        asv_fc2_w=w(ks[10], hidden, hidden), asv_fc2_b=b(ks[11], hidden),
        out_w=w(ks[12], hidden, 1), out_b=b(ks[13], 1),
    )


def pack_params(params, C, H):
    """Offline prep (done once): fold SReLU's Wa into cm_fc1/cm_fc2 (weights +
    biases), pack all matrix/row parameters into ONE contiguous f32 buffer, and
    return the two scalar biases as a tiny (2,) array for SMEM."""
    W = max(C, H)
    wa_t = params["wa"].T
    w1 = params["cm_fc1_w"] @ wa_t
    b1 = params["cm_fc1_b"] @ wa_t
    w2 = params["cm_fc2_w"] @ wa_t
    b2 = params["cm_fc2_b"] @ wa_t

    rv = 3 * C + 2 * H
    pack = jnp.zeros((rv + 7, W), jnp.float32)
    pack = pack.at[0:C, 0:C].set(w1)
    pack = pack.at[C:2 * C, 0:C].set(w2)
    pack = pack.at[2 * C:3 * C, 0:C].set(params["cm_fc3_w"])
    pack = pack.at[3 * C:3 * C + H, 0:H].set(params["asv_fc1_w"])
    pack = pack.at[3 * C + H:3 * C + 2 * H, 0:H].set(params["asv_fc2_w"])
    pack = pack.at[rv + 0, 0:C].set(b1[0])
    pack = pack.at[rv + 1, 0:C].set(b2[0])
    pack = pack.at[rv + 2, 0:C].set(params["cm_fc3_b"][0])
    pack = pack.at[rv + 3, 0:C].set(params["cm_score_w"][:, 0])
    pack = pack.at[rv + 4, 0:H].set(params["asv_fc1_b"][0])
    pack = pack.at[rv + 5, 0:H].set(params["asv_fc2_b"][0])
    pack = pack.at[rv + 6, 0:H].set(params["out_w"][:, 0])

    scalar_biases = jnp.array(
        [params["cm_score_b"][0, 0], params["out_b"][0, 0]], dtype=jnp.float32)
    return pack, scalar_biases


def _pick_batch_tile(B):
    """Batch-tile policy (all generations):
      * B <= 256: one grid step (kernel is launch/overhead bound; splitting a
        tiny batch buys nothing, even on v7x).
      * B  > 256: as large as possible per step (amortizes the ~0.35us grid
        step overhead and MXU fill/drain on these K,N<=64 matmuls), capped at
        2048 rows, while keeping >= 2 grid steps so the "parallel" axis shards
        across v7x's two TensorCores.  Per-step VMEM stays well under every
        generation's default scoped limit, so no vmem_limit_bytes needed."""
    if B <= 256:
        return B
    n_steps = max(2, pl.cdiv(B, 2048))
    tb = pl.cdiv(B, n_steps)
    return min(B, ((tb + 7) // 8) * 8)      # sublane multiple of 8


def sasv_score_attention(asv_features, cm_embeddings, packed_w, scalar_biases,
                         C, H, compute_dtype=jnp.bfloat16):
    B = asv_features.shape[0]
    n_rows, W = packed_w.shape

    TB = _pick_batch_tile(B)
    grid = (pl.cdiv(B, TB),)

    out = pl.pallas_call(
        functools.partial(saga_kernel, C=C, H=H, compute_dtype=compute_dtype),
        out_shape=jax.ShapeDtypeStruct((B, 2), jnp.float32),
        grid=grid,
        in_specs=[
            pl.BlockSpec((TB, H), lambda i: (i, 0)),        # asv_features
            pl.BlockSpec((TB, C), lambda i: (i, 0)),        # cm_embeddings
            pl.BlockSpec((n_rows, W), lambda i: (0, 0)),    # packed weights (resident)
            pl.BlockSpec(memory_space=pltpu.MemorySpace.SMEM),  # scalar biases
        ],
        out_specs=pl.BlockSpec((TB, 2), lambda i: (i, 0)),
        compiler_params=pltpu.CompilerParams(
            dimension_semantics=("parallel",)),
    )(asv_features, cm_embeddings, packed_w, scalar_biases)

    x_pred = out[:, 0:1]
    cm_score = out[:, 1:2]
    return x_pred, cm_score


def reference_jax(asv, cm, p):
    # Pure-JAX reference with the ORIGINAL (unfolded) parameters, f32 end-to-end.
    x = jnp.maximum((cm @ p["cm_fc1_w"] + p["cm_fc1_b"]) @ p["wa"].T, 0.0)
    x = jnp.maximum((x @ p["cm_fc2_w"] + p["cm_fc2_b"]) @ p["wa"].T, 0.0)
    x = x @ p["cm_fc3_w"] + p["cm_fc3_b"]
    x = x / jnp.maximum(jnp.linalg.norm(x, axis=1, keepdims=True), 1e-12)
    cm_score = x @ p["cm_score_w"] + p["cm_score_b"]
    r = jnp.maximum(asv @ p["asv_fc1_w"] + p["asv_fc1_b"], 0.0)
    r = r / jnp.maximum(jnp.linalg.norm(r, axis=1, keepdims=True), 1e-12)
    r = jax.nn.sigmoid(cm_score) * r
    r = jnp.maximum(r @ p["asv_fc2_w"] + p["asv_fc2_b"], 0.0)
    x_pred = r @ p["out_w"] + p["out_b"]
    return x_pred, cm_score


if __name__ == "__main__":
    batch = 8
    asv_embed_dim = 32          # hidden_dim = 2 * asv_embed_dim = 64
    cm_embed_dim = 32
    C = cm_embed_dim
    H = 2 * asv_embed_dim

    key = jax.random.PRNGKey(0)
    k_asv, k_cm, k_par = jax.random.split(key, 3)
    asv_features = jax.random.normal(k_asv, (batch, H), dtype=jnp.float32)
    cm_embeddings = jax.random.normal(k_cm, (batch, C), dtype=jnp.float32)
    params = init_params(k_par, asv_embed_dim, cm_embed_dim)

    # Offline: fold Wa and pack everything (done once).
    packed, scalar_b = pack_params(params, C, H)

    # Original-semantics f32 reference.
    x_ref, s_ref = reference_jax(asv_features, cm_embeddings, params)

    # 1) f32 compute path: tight check of the fusion / Wa-fold / normalize logic.
    x32, s32 = sasv_score_attention(asv_features, cm_embeddings, packed, scalar_b,
                                    C, H, compute_dtype=jnp.float32)
    jax.block_until_ready((x32, s32))
    assert jnp.allclose(x32, x_ref, atol=1e-4, rtol=1e-4)
    assert jnp.allclose(s32, s_ref, atol=1e-4, rtol=1e-4)

    # 2) Default fast path: bf16 MXU operands, f32 accumulation & elementwise.
    #    Relaxed tolerance vs the f32 reference covers bf16 operand rounding.
    x_pred, cm_score = sasv_score_attention(asv_features, cm_embeddings, packed,
                                            scalar_b, C, H,
                                            compute_dtype=jnp.bfloat16)
    jax.block_until_ready((x_pred, cm_score))
    assert jnp.allclose(x_pred, x_ref, atol=5e-2, rtol=5e-2)
    assert jnp.allclose(cm_score, s_ref, atol=5e-2, rtol=5e-2)

    print("KERNEL_OK")
</pallas_src>

<mosaic_0001>
module attributes {stable_mosaic.version = 11 : i64} {
  func.func @saga_kernel(%arg0: i32, %arg1: memref<8x64xf32, #tpu.memory_space<vmem>>, %arg2: memref<8x32xf32, #tpu.memory_space<vmem>>, %arg3: memref<231x64xf32, #tpu.memory_space<vmem>>, %arg4: memref<2xf32, #tpu.memory_space<smem>>, %arg5: memref<8x2xf32, #tpu.memory_space<vmem>>) attributes {dimension_semantics = [#tpu.dimension_semantics<parallel>], iteration_bounds = array<i64: 1>, scalar_prefetch = 0 : i64, scratch_operands = 0 : i64, tpu.core_type = #tpu.core_type<tc>, window_params = [{transform_indices = @transform_0, window_bounds = array<i64: 8, 64>}, {transform_indices = @transform_1, window_bounds = array<i64: 8, 32>}, {pipeline_mode = #tpu.pipeline_mode<synchronous>, transform_indices = @transform_2, window_bounds = array<i64: 231, 64>}, {transform_indices = @transform_3, window_bounds = array<i64: 2>}, {transform_indices = @transform_4, window_bounds = array<i64: 8, 2>}]} {
    %c0 = arith.constant 0 : index
    %c0_0 = arith.constant 0 : index
    %0 = vector.load %arg2[%c0, %c0_0] : memref<8x32xf32, #tpu.memory_space<vmem>>, vector<8x32xf32>
    %c0_1 = arith.constant 0 : index
    %c0_2 = arith.constant 0 : index
    %1 = vector.load %arg1[%c0_1, %c0_2] : memref<8x64xf32, #tpu.memory_space<vmem>>, vector<8x64xf32>
    %c0_3 = arith.constant 0 : index
    %c0_4 = arith.constant 0 : index
    %2 = vector.load %arg3[%c0_3, %c0_4] : memref<231x64xf32, #tpu.memory_space<vmem>>, vector<32x32xf32>
    %c32 = arith.constant 32 : index
    %c0_5 = arith.constant 0 : index
    %3 = vector.load %arg3[%c32, %c0_5] : memref<231x64xf32, #tpu.memory_space<vmem>>, vector<32x32xf32>
    %c64 = arith.constant 64 : index
    %c0_6 = arith.constant 0 : index
    %4 = vector.load %arg3[%c64, %c0_6] : memref<231x64xf32, #tpu.memory_space<vmem>>, vector<32x32xf32>
    %c96 = arith.constant 96 : index
    %c0_7 = arith.constant 0 : index
    %5 = vector.load %arg3[%c96, %c0_7] : memref<231x64xf32, #tpu.memory_space<vmem>>, vector<64x64xf32>
    %c160 = arith.constant 160 : index
    %c0_8 = arith.constant 0 : index
    %6 = vector.load %arg3[%c160, %c0_8] : memref<231x64xf32, #tpu.memory_space<vmem>>, vector<64x64xf32>
    %c224 = arith.constant 224 : index
    %c0_9 = arith.constant 0 : index
    %7 = vector.load %arg3[%c224, %c0_9] : memref<231x64xf32, #tpu.memory_space<vmem>>, vector<1x32xf32>
    %c225 = arith.constant 225 : index
    %c0_10 = arith.constant 0 : index
    %8 = vector.load %arg3[%c225, %c0_10] : memref<231x64xf32, #tpu.memory_space<vmem>>, vector<1x32xf32>
    %c226 = arith.constant 226 : index
    %c0_11 = arith.constant 0 : index
    %9 = vector.load %arg3[%c226, %c0_11] : memref<231x64xf32, #tpu.memory_space<vmem>>, vector<1x32xf32>
    %c227 = arith.constant 227 : index
    %c0_12 = arith.constant 0 : index
    %10 = vector.load %arg3[%c227, %c0_12] : memref<231x64xf32, #tpu.memory_space<vmem>>, vector<1x32xf32>
    %c228 = arith.constant 228 : index
    %c0_13 = arith.constant 0 : index
    %11 = vector.load %arg3[%c228, %c0_13] : memref<231x64xf32, #tpu.memory_space<vmem>>, vector<1x64xf32>
    %c229 = arith.constant 229 : index
    %c0_14 = arith.constant 0 : index
    %12 = vector.load %arg3[%c229, %c0_14] : memref<231x64xf32, #tpu.memory_space<vmem>>, vector<1x64xf32>
    %c230 = arith.constant 230 : index
    %c0_15 = arith.constant 0 : index
    %13 = vector.load %arg3[%c230, %c0_15] : memref<231x64xf32, #tpu.memory_space<vmem>>, vector<1x64xf32>
    %c0_16 = arith.constant 0 : index
    %14 = memref.load %arg4[%c0_16] : memref<2xf32, #tpu.memory_space<smem>>
    %c1 = arith.constant 1 : index
    %15 = memref.load %arg4[%c1] : memref<2xf32, #tpu.memory_space<smem>>
    %cst = arith.constant dense<0.000000e+00> : vector<8x32xf32>
    %16 = tpu.matmul %0, %2, %cst {dimension_numbers = #tpu.dot_dimension_numbers<[1], [0], [0], [1], [0, 0, 1, 1], [], []>} : vector<8x32xf32>, vector<32x32xf32>, vector<8x32xf32> -> vector<8x32xf32>
    %17 = vector.broadcast %7 : vector<1x32xf32> to vector<8x32xf32>
    %18 = arith.addf %16, %17 : vector<8x32xf32>
    %cst_17 = arith.constant 0.000000e+00 : f32
    %19 = vector.broadcast %cst_17 : f32 to vector<8x32xf32>
    %20 = arith.maximumf %18, %19 : vector<8x32xf32>
    %cst_18 = arith.constant dense<0.000000e+00> : vector<8x32xf32>
    %21 = tpu.matmul %20, %3, %cst_18 {dimension_numbers = #tpu.dot_dimension_numbers<[1], [0], [0], [1], [0, 0, 1, 1], [], []>} : vector<8x32xf32>, vector<32x32xf32>, vector<8x32xf32> -> vector<8x32xf32>
    %22 = vector.broadcast %8 : vector<1x32xf32> to vector<8x32xf32>
    %23 = arith.addf %21, %22 : vector<8x32xf32>
    %cst_19 = arith.constant 0.000000e+00 : f32
    %24 = vector.broadcast %cst_19 : f32 to vector<8x32xf32>
    %25 = arith.maximumf %23, %24 : vector<8x32xf32>
    %cst_20 = arith.constant dense<0.000000e+00> : vector<8x32xf32>
    %26 = tpu.matmul %25, %4, %cst_20 {dimension_numbers = #tpu.dot_dimension_numbers<[1], [0], [0], [1], [0, 0, 1, 1], [], []>} : vector<8x32xf32>, vector<32x32xf32>, vector<8x32xf32> -> vector<8x32xf32>
    %27 = vector.broadcast %9 : vector<1x32xf32> to vector<8x32xf32>
    %28 = arith.addf %26, %27 : vector<8x32xf32>
    %29 = arith.mulf %28, %28 : vector<8x32xf32>
    %cst_21 = arith.constant dense<0.000000e+00> : vector<8xf32>
    %30 = vector.multi_reduction <add>, %29, %cst_21 [1] : vector<8x32xf32> to vector<8xf32>
    %31 = vector.shape_cast %30 : vector<8xf32> to vector<8x1xf32>
    %cst_22 = arith.constant 1.000000e-24 : f32
    %32 = vector.broadcast %cst_22 : f32 to vector<8x1xf32>
    %33 = arith.maximumf %31, %32 : vector<8x1xf32>
    %34 = math.rsqrt %33 : vector<8x1xf32>
    %35 = vector.broadcast %34 : vector<8x1xf32> to vector<8x32xf32>
    %36 = arith.mulf %28, %35 : vector<8x32xf32>
    %37 = vector.broadcast %10 : vector<1x32xf32> to vector<8x32xf32>
    %38 = arith.mulf %36, %37 : vector<8x32xf32>
    %cst_23 = arith.constant dense<0.000000e+00> : vector<8xf32>
    %39 = vector.multi_reduction <add>, %38, %cst_23 [1] : vector<8x32xf32> to vector<8xf32>
    %40 = vector.shape_cast %39 : vector<8xf32> to vector<8x1xf32>
    %41 = vector.broadcast %14 : f32 to vector<8x1xf32>
    %42 = arith.addf %40, %41 : vector<8x1xf32>
    %cst_24 = arith.constant dense<0.000000e+00> : vector<8x64xf32>
    %43 = tpu.matmul %1, %5, %cst_24 {dimension_numbers = #tpu.dot_dimension_numbers<[1], [0], [0], [1], [0, 0, 1, 1], [], []>} : vector<8x64xf32>, vector<64x64xf32>, vector<8x64xf32> -> vector<8x64xf32>
    %44 = vector.broadcast %11 : vector<1x64xf32> to vector<8x64xf32>
    %45 = arith.addf %43, %44 : vector<8x64xf32>
    %cst_25 = arith.constant 0.000000e+00 : f32
    %46 = vector.broadcast %cst_25 : f32 to vector<8x64xf32>
    %47 = arith.maximumf %45, %46 : vector<8x64xf32>
    %48 = arith.mulf %47, %47 : vector<8x64xf32>
    %cst_26 = arith.constant dense<0.000000e+00> : vector<8xf32>
    %49 = vector.multi_reduction <add>, %48, %cst_26 [1] : vector<8x64xf32> to vector<8xf32>
    %50 = vector.shape_cast %49 : vector<8xf32> to vector<8x1xf32>
    %cst_27 = arith.constant 1.000000e-24 : f32
    %51 = vector.broadcast %cst_27 : f32 to vector<8x1xf32>
    %52 = arith.maximumf %50, %51 : vector<8x1xf32>
    %53 = math.rsqrt %52 : vector<8x1xf32>
    %54 = vector.broadcast %53 : vector<8x1xf32> to vector<8x64xf32>
    %55 = arith.mulf %47, %54 : vector<8x64xf32>
    %56 = arith.negf %42 : vector<8x1xf32>
    %57 = math.exp %56 : vector<8x1xf32>
    %cst_28 = arith.constant 1.000000e+00 : f32
    %58 = vector.broadcast %cst_28 : f32 to vector<8x1xf32>
    %59 = arith.addf %58, %57 : vector<8x1xf32>
    %60 = arith.divf %58, %59 : vector<8x1xf32>
    %61 = vector.broadcast %60 : vector<8x1xf32> to vector<8x64xf32>
    %62 = arith.mulf %61, %55 : vector<8x64xf32>
    %cst_29 = arith.constant dense<0.000000e+00> : vector<8x64xf32>
    %63 = tpu.matmul %62, %6, %cst_29 {dimension_numbers = #tpu.dot_dimension_numbers<[1], [0], [0], [1], [0, 0, 1, 1], [], []>} : vector<8x64xf32>, vector<64x64xf32>, vector<8x64xf32> -> vector<8x64xf32>
    %64 = vector.broadcast %12 : vector<1x64xf32> to vector<8x64xf32>
    %65 = arith.addf %63, %64 : vector<8x64xf32>
    %cst_30 = arith.constant 0.000000e+00 : f32
    %66 = vector.broadcast %cst_30 : f32 to vector<8x64xf32>
    %67 = arith.maximumf %65, %66 : vector<8x64xf32>
    %68 = vector.broadcast %13 : vector<1x64xf32> to vector<8x64xf32>
    %69 = arith.mulf %67, %68 : vector<8x64xf32>
    %cst_31 = arith.constant dense<0.000000e+00> : vector<8xf32>
    %70 = vector.multi_reduction <add>, %69, %cst_31 [1] : vector<8x64xf32> to vector<8xf32>
    %71 = vector.shape_cast %70 : vector<8xf32> to vector<8x1xf32>
    %72 = vector.broadcast %15 : f32 to vector<8x1xf32>
    %73 = arith.addf %71, %72 : vector<8x1xf32>
    %74 = tpu.concatenate %73, %42 in 1 : vector<8x1xf32>, vector<8x1xf32> -> vector<8x2xf32>
    %c0_32 = arith.constant 0 : index
    %c0_33 = arith.constant 0 : index
    %75 = vector.load %arg5[%c0_32, %c0_33] : memref<8x2xf32, #tpu.memory_space<vmem>>, vector<8x2xf32>
    tpu.vector_store %arg5[%c0_32, %c0_33], %74 {strides = array<i32>} : memref<8x2xf32, #tpu.memory_space<vmem>>, vector<8x2xf32>,
    return
  }
  func.func @transform_0(%arg0: i32) -> (i32, i32) {
    %c0_i32 = arith.constant 0 : i32
    %c0_i32_0 = arith.constant 0 : i32
    return %arg0, %c0_i32 : i32, i32
  }
  func.func @transform_1(%arg0: i32) -> (i32, i32) {
    %c0_i32 = arith.constant 0 : i32
    %c0_i32_0 = arith.constant 0 : i32
    return %arg0, %c0_i32 : i32, i32
  }
  func.func @transform_2(%arg0: i32) -> (i32, i32) {
    %c0_i32 = arith.constant 0 : i32
    %c0_i32_0 = arith.constant 0 : i32
    %c0_i32_1 = arith.constant 0 : i32
    return %c0_i32, %c0_i32_0 : i32, i32
  }
  func.func @transform_3(%arg0: i32) -> i32 {
    %c0_i32 = arith.constant 0 : i32
    %c0_i32_0 = arith.constant 0 : i32
    return %c0_i32 : i32
  }
  func.func @transform_4(%arg0: i32) -> (i32, i32) {
    %c0_i32 = arith.constant 0 : i32
    %c0_i32_0 = arith.constant 0 : i32
    return %arg0, %c0_i32 : i32, i32
  }
}

</mosaic_0001>

<llo_original>
// kernel: tpu_custom_call.1
$region0: #{tpu_custom_call.1}
  #allocation0 [shape = 'u32[]', space=smem, size = 0x4, offset = 0x4, fixed_abs, tag = 'smem constant byte address 0x4 - core index']
  #allocation1 [shape = 'u32[144,128]{1,0:T(1,128)}', space=vmem, size = 0x12000, scoped, tag = 'internal scratch']
  %s0 = inlined_call_operand.vmem [shape: f32[8,64], index: 0, kind: input, shape index: {}]
  %s1 = inlined_call_operand.vmem [shape: f32[8,32], index: 1, kind: input, shape index: {}]
  %s2 = inlined_call_operand.vmem [shape: f32[231,64], index: 2, kind: input, shape index: {}]
  %s3 = inlined_call_operand.vmem [shape: f32[2], index: 3, kind: input, shape index: {}]
  %s4 = inlined_call_operand.vmem [shape: f32[8,2], index: 4, kind: output, shape index: {}]
  %s5 = sld [smem:[#allocation0]]
  $region30: #{tpu_custom_call.1} parent=0
    _
  %s7 = ssub.s32 1, %s5
  %s8 = scalar_select 0, %s7, %s5
  $region1: #{tpu_custom_call.1} parent=0
    #allocation2 [shape = 'u8[512]{0}', space=smem, size = 0x200, scoped, tag = 'input window, operand 3, single buffered']
    #allocation3 [shape = 's32[1]{0}', space=sflag, size = 0x4, scoped, tag = 'scoped memory for tpu_custom_call.1']
    %9 = vsyncpa [#allocation3], 0
    // Predicated region
    $region2: #{tpu_custom_call.1} parent=1 // pred_check
      _
    $region3: #{tpu_custom_call.1} parent=1 // pred_check_branch
      %11 = sbr.rel (0) target = $region5
    $region4: #{tpu_custom_call.1} parent=1 // pred_region
      _
    $region5: #{tpu_custom_call.1} parent=1 // pred_fallthru
      _
    // Predicated region
    $region6: #{tpu_custom_call.1} parent=1 // pred_check
      _
    $region7: #{tpu_custom_call.1} parent=1 // pred_check_branch
      %13 = sbr.rel (0) target = $region9
    $region8: #{tpu_custom_call.1} parent=1 // pred_region
      _
    $region9: #{tpu_custom_call.1} parent=1 // pred_fallthru
      _
    // Predicated region
    $region10: #{tpu_custom_call.1} parent=1 // pred_check
      _
    $region11: #{tpu_custom_call.1} parent=1 // pred_check_branch
      %15 = sbr.rel (0) target = $region13
    $region12: #{tpu_custom_call.1} parent=1 // pred_region
      _
    $region13: #{tpu_custom_call.1} parent=1 // pred_fallthru
      _
    // Predicated region
    $region14: #{tpu_custom_call.1} parent=1 // pred_check
      _
    $region15: #{tpu_custom_call.1} parent=1 // pred_check_branch
      %17 = sbr.rel (0) target = $region17
    $region16: #{tpu_custom_call.1} parent=1 // pred_region
      %s19 = ssub.s32 16, 16
      %20 = vsyncadd [#allocation3], %s19
      %s22 = sshll.u32 %s3, 4
      %s23 = int_to_ptr.vmem [resolvable:$true] %s22
      %25 = dma.vmem_to_smem %s23, 16, [#allocation2], [#allocation3]
    $region17: #{tpu_custom_call.1} parent=1 // pred_fallthru
      _
    // Predicated region
    $region18: #{tpu_custom_call.1} parent=1 // pred_check
      _
    $region19: #{tpu_custom_call.1} parent=1 // pred_check_branch
      %27 = sbr.rel (0) target = $region21
    $region20: #{tpu_custom_call.1} parent=1 // pred_region
      %28 = dma.done [#allocation3], 16
    $region21: #{tpu_custom_call.1} parent=1 // pred_fallthru
      _
    %29 = sfence
    %v30 = vld [vmem:[%s1] sm:$0xff]
    %v31 = vld [vmem:[%s0] sm:$0xff]
    %v32 = vld [vmem:[%s2] sm:$0xff]
    %v33 = vld [vmem:[%s2 + $0x8] sm:$0xff]
    %v34 = vld [vmem:[%s2 + $0x10] sm:$0xff]
    %v35 = vld [vmem:[%s2 + $0x18] sm:$0xff]
    %v36 = vld [vmem:[%s2 + $0x20] sm:$0xff]
    %v37 = vld [vmem:[%s2 + $0x28] sm:$0xff]
    %v38 = vld [vmem:[%s2 + $0x30] sm:$0xff]
    %v39 = vld [vmem:[%s2 + $0x38] sm:$0xff]
    %v40 = vld [vmem:[%s2 + $0x40] sm:$0xff]
    %v41 = vld [vmem:[%s2 + $0x48] sm:$0xff]
    %v42 = vld [vmem:[%s2 + $0x50] sm:$0xff]
    %v43 = vld [vmem:[%s2 + $0x58] sm:$0xff]
    %v44 = vld [vmem:[%s2 + $0x60] sm:$0xff]
    %v45 = vld [vmem:[%s2 + $0x68] sm:$0xff]
    %v46 = vld [vmem:[%s2 + $0x70] sm:$0xff]
    %v47 = vld [vmem:[%s2 + $0x78] sm:$0xff]
    %v48 = vld [vmem:[%s2 + $0x80] sm:$0xff]
    %v49 = vld [vmem:[%s2 + $0x88] sm:$0xff]
    %v50 = vld [vmem:[%s2 + $0x90] sm:$0xff]
    %v51 = vld [vmem:[%s2 + $0x98] sm:$0xff]
    %v52 = vld [vmem:[%s2 + $0xa0] sm:$0xff]
    %v53 = vld [vmem:[%s2 + $0xa8] sm:$0xff]
    %v54 = vld [vmem:[%s2 + $0xb0] sm:$0xff]
    %v55 = vld [vmem:[%s2 + $0xb8] sm:$0xff]
    %v56 = vld [vmem:[%s2 + $0xc0] sm:$0xff]
    %v57 = vld [vmem:[%s2 + $0xc8] sm:$0xff]
    %v58 = vld [vmem:[%s2 + $0xd0] sm:$0xff]
    %v59 = vld [vmem:[%s2 + $0xd8] sm:$0xff]
    %v60 = vld [vmem:[%s2 + $0xe0] sm:$0x1]
    %v61 = vld [vmem:[%s2 + $0xe1] sm:$0x1]
    %v62 = vld [vmem:[%s2 + $0xe2] sm:$0x1]
    %v63 = vld [vmem:[%s2 + $0xe3] sm:$0x1]
    %v64 = vld [vmem:[%s2 + $0xe4] sm:$0x1]
    %v65 = vld [vmem:[%s2 + $0xe5] sm:$0x1]
    %v66 = vld [vmem:[%s2 + $0xe6] sm:$0x1]
    %s67 = sld [smem:[#allocation2]]
    %s68 = sld [smem:[#allocation2 + $0x1]]
    %v69 = vlaneseq
    %v70 = vshrl.u32 %v69, 7
    %v71 = vsub.s32 0, %v70
    %v72 = vrot.slane %v60, %v71
    %vm73 = vcmask 261120
    %v75 = vsel %vm73, %v30, 0
    %77 = vmatprep.subr.mxu0 0.0
    %78 = vmatpush1.msra.mxu0 0.0
    %79 = vmatprep.subr.mxu0 0.0
    %80 = vmatpush1.msra.mxu0 0.0
    %81 = vmatprep.subr.mxu0 0.0
    %82 = vmatpush1.msra.mxu0 0.0
    %83 = vmatprep.subr.mxu0 0.0
    %84 = vmatpush1.msra.mxu0 0.0
    %85 = vmatprep.subr.mxu0 0.0
    %86 = vmatpush1.msra.mxu0 0.0
    %87 = vmatprep.subr.mxu0 0.0
    %88 = vmatpush1.msra.mxu0 0.0
    %89 = vmatprep.subr.mxu0 0.0
    %90 = vmatpush1.msra.mxu0 0.0
    %91 = vmatprep.subr.mxu0 0.0
    %92 = vmatpush1.msra.mxu0 0.0
    %93 = vmatprep.subr.mxu0 0.0
    %94 = vmatpush1.msra.mxu0 0.0
    %95 = vmatprep.subr.mxu0 0.0
    %96 = vmatpush1.msra.mxu0 0.0
    %97 = vmatprep.subr.mxu0 0.0
    %98 = vmatpush1.msra.mxu0 0.0
    %99 = vmatprep.subr.mxu0 0.0
    %100 = vmatpush1.msra.mxu0 0.0
    %101 = vmatprep.subr.mxu0 0.0
    %102 = vmatpush1.msra.mxu0 %v35
    %103 = vmatprep.subr.mxu0 0.0
    %104 = vmatpush1.msra.mxu0 %v34
    %105 = vmatprep.subr.mxu0 0.0
    %106 = vmatpush1.msra.mxu0 %v33
    %107 = vmatprep.subr.mxu0 0.0
    %108 = vmatpush1.msra.mxu0 %v32
    %109 = vmatprep.subr.mxu0 0.0
    %110 = vmatpush2.msra.mxu0 0.0
    %111 = vmatprep.subr.mxu0 0.0
    %112 = vmatpush2.msra.mxu0 0.0
    %113 = vmatprep.subr.mxu0 0.0
    %114 = vmatpush2.msra.mxu0 0.0
    %115 = vmatprep.subr.mxu0 0.0
    %116 = vmatpush2.msra.mxu0 0.0
    %117 = vmatprep.subr.mxu0 0.0
    %118 = vmatpush2.msra.mxu0 0.0
    %119 = vmatprep.subr.mxu0 0.0
    %120 = vmatpush2.msra.mxu0 0.0
    %121 = vmatprep.subr.mxu0 0.0
    %122 = vmatpush2.msra.mxu0 0.0
    %123 = vmatprep.subr.mxu0 0.0
    %124 = vmatpush2.msra.mxu0 0.0
    %125 = vmatprep.subr.mxu0 0.0
    %126 = vmatpush2.msra.mxu0 0.0
    %127 = vmatprep.subr.mxu0 0.0
    %128 = vmatpush2.msra.mxu0 0.0
    %129 = vmatprep.subr.mxu0 0.0
    %130 = vmatpush2.msra.mxu0 0.0
    %131 = vmatprep.subr.mxu0 0.0
    %132 = vmatpush2.msra.mxu0 0.0
    %133 = vmatprep.subr.mxu0 0.0
    %134 = vmatpush2.msra.mxu0 0.0
    %135 = vmatprep.subr.mxu0 0.0
    %136 = vmatpush2.msra.mxu0 0.0
    %137 = vmatprep.subr.mxu0 0.0
    %138 = vmatpush2.msra.mxu0 0.0
    %139 = vmatprep.subr.mxu0 0.0
    %140 = vmatpush2.msra.mxu0 0.0
    %141 = vmatprep.mubr.f32.mxu0 0.0
    %142 = vmatmul.mubr.f32.gmra.mxu0 %v75
    %v143 = vpop.f32.mrf.mxu0
    %v144 = vadd.f32 %v72, %v143
    %v145 = vpop.f32.mrf.mxu0
    %146 = vdwg.mxu0
    %v147 = vmax.f32 %v144, 0.0
    %v148 = vlaneseq
    %v149 = vshrl.u32 %v148, 7
    %v150 = vsub.s32 0, %v149
    %v151 = vrot.slane %v61, %v150
    %v153 = vsel %vm73, %v147, 0
    %155 = vmatprep.subr.mxu0 0.0
    %156 = vmatpush1.msra.mxu0 0.0
    %157 = vmatprep.subr.mxu0 0.0
    %158 = vmatpush1.msra.mxu0 0.0
    %159 = vmatprep.subr.mxu0 0.0
    %160 = vmatpush1.msra.mxu0 0.0
    %161 = vmatprep.subr.mxu0 0.0
    %162 = vmatpush1.msra.mxu0 0.0
    %163 = vmatprep.subr.mxu0 0.0
    %164 = vmatpush1.msra.mxu0 0.0
    %165 = vmatprep.subr.mxu0 0.0
    %166 = vmatpush1.msra.mxu0 0.0
    %167 = vmatprep.subr.mxu0 0.0
    %168 = vmatpush1.msra.mxu0 0.0
    %169 = vmatprep.subr.mxu0 0.0
    %170 = vmatpush1.msra.mxu0 0.0
    %171 = vmatprep.subr.mxu0 0.0
    %172 = vmatpush1.msra.mxu0 0.0
    %173 = vmatprep.subr.mxu0 0.0
    %174 = vmatpush1.msra.mxu0 0.0
    %175 = vmatprep.subr.mxu0 0.0
    %176 = vmatpush1.msra.mxu0 0.0
    %177 = vmatprep.subr.mxu0 0.0
    %178 = vmatpush1.msra.mxu0 0.0
    %179 = vmatprep.subr.mxu0 0.0
    %180 = vmatpush1.msra.mxu0 %v39
    %181 = vmatprep.subr.mxu0 0.0
    %182 = vmatpush1.msra.mxu0 %v38
    %183 = vmatprep.subr.mxu0 0.0
    %184 = vmatpush1.msra.mxu0 %v37
    %185 = vmatprep.subr.mxu0 0.0
    %186 = vmatpush1.msra.mxu0 %v36
    %187 = vmatprep.subr.mxu0 0.0
    %188 = vmatpush2.msra.mxu0 0.0
    %189 = vmatprep.subr.mxu0 0.0
    %190 = vmatpush2.msra.mxu0 0.0
    %191 = vmatprep.subr.mxu0 0.0
    %192 = vmatpush2.msra.mxu0 0.0
    %193 = vmatprep.subr.mxu0 0.0
    %194 = vmatpush2.msra.mxu0 0.0
    %195 = vmatprep.subr.mxu0 0.0
    %196 = vmatpush2.msra.mxu0 0.0
    %197 = vmatprep.subr.mxu0 0.0
    %198 = vmatpush2.msra.mxu0 0.0
    %199 = vmatprep.subr.mxu0 0.0
    %200 = vmatpush2.msra.mxu0 0.0
    %201 = vmatprep.subr.mxu0 0.0
    %202 = vmatpush2.msra.mxu0 0.0
    %203 = vmatprep.subr.mxu0 0.0
    %204 = vmatpush2.msra.mxu0 0.0
    %205 = vmatprep.subr.mxu0 0.0
    %206 = vmatpush2.msra.mxu0 0.0
    %207 = vmatprep.subr.mxu0 0.0
    %208 = vmatpush2.msra.mxu0 0.0
    %209 = vmatprep.subr.mxu0 0.0
    %210 = vmatpush2.msra.mxu0 0.0
    %211 = vmatprep.subr.mxu0 0.0
    %212 = vmatpush2.msra.mxu0 0.0
    %213 = vmatprep.subr.mxu0 0.0
    %214 = vmatpush2.msra.mxu0 0.0
    %215 = vmatprep.subr.mxu0 0.0
    %216 = vmatpush2.msra.mxu0 0.0
    %217 = vmatprep.subr.mxu0 0.0
    %218 = vmatpush2.msra.mxu0 0.0
    %219 = vmatprep.mubr.f32.mxu0 0.0
    %220 = vmatmul.mubr.f32.gmra.mxu0 %v153
    %v221 = vpop.f32.mrf.mxu0
    %v222 = vadd.f32 %v151, %v221
    %v223 = vpop.f32.mrf.mxu0
    %224 = vdwg.mxu0
    %v225 = vmax.f32 %v222, 0.0
    %v226 = vlaneseq
    %v227 = vshrl.u32 %v226, 7
    %v228 = vsub.s32 0, %v227
    %v229 = vrot.slane %v62, %v228
    %v231 = vsel %vm73, %v225, 0
    %233 = vmatprep.subr.mxu0 0.0
    %234 = vmatpush1.msra.mxu0 0.0
    %235 = vmatprep.subr.mxu0 0.0
    %236 = vmatpush1.msra.mxu0 0.0
    %237 = vmatprep.subr.mxu0 0.0
    %238 = vmatpush1.msra.mxu0 0.0
    %239 = vmatprep.subr.mxu0 0.0
    %240 = vmatpush1.msra.mxu0 0.0
    %241 = vmatprep.subr.mxu0 0.0
    %242 = vmatpush1.msra.mxu0 0.0
    %243 = vmatprep.subr.mxu0 0.0
    %244 = vmatpush1.msra.mxu0 0.0
    %245 = vmatprep.subr.mxu0 0.0
    %246 = vmatpush1.msra.mxu0 0.0
    %247 = vmatprep.subr.mxu0 0.0
    %248 = vmatpush1.msra.mxu0 0.0
    %249 = vmatprep.subr.mxu0 0.0
    %250 = vmatpush1.msra.mxu0 0.0
    %251 = vmatprep.subr.mxu0 0.0
    %252 = vmatpush1.msra.mxu0 0.0
    %253 = vmatprep.subr.mxu0 0.0
    %254 = vmatpush1.msra.mxu0 0.0
    %255 = vmatprep.subr.mxu0 0.0
    %256 = vmatpush1.msra.mxu0 0.0
    %257 = vmatprep.subr.mxu0 0.0
    %258 = vmatpush1.msra.mxu0 %v43
    %259 = vmatprep.subr.mxu0 0.0
    %260 = vmatpush1.msra.mxu0 %v42
    %261 = vmatprep.subr.mxu0 0.0
    %262 = vmatpush1.msra.mxu0 %v41
    %263 = vmatprep.subr.mxu0 0.0
    %264 = vmatpush1.msra.mxu0 %v40
    %265 = vmatprep.subr.mxu0 0.0
    %266 = vmatpush2.msra.mxu0 0.0
    %267 = vmatprep.subr.mxu0 0.0
    %268 = vmatpush2.msra.mxu0 0.0
    %269 = vmatprep.subr.mxu0 0.0
    %270 = vmatpush2.msra.mxu0 0.0
    %271 = vmatprep.subr.mxu0 0.0
    %272 = vmatpush2.msra.mxu0 0.0
    %273 = vmatprep.subr.mxu0 0.0
    %274 = vmatpush2.msra.mxu0 0.0
    %275 = vmatprep.subr.mxu0 0.0
    %276 = vmatpush2.msra.mxu0 0.0
    %277 = vmatprep.subr.mxu0 0.0
    %278 = vmatpush2.msra.mxu0 0.0
    %279 = vmatprep.subr.mxu0 0.0
    %280 = vmatpush2.msra.mxu0 0.0
    %281 = vmatprep.subr.mxu0 0.0
    %282 = vmatpush2.msra.mxu0 0.0
    %283 = vmatprep.subr.mxu0 0.0
    %284 = vmatpush2.msra.mxu0 0.0
    %285 = vmatprep.subr.mxu0 0.0
    %286 = vmatpush2.msra.mxu0 0.0
    %287 = vmatprep.subr.mxu0 0.0
    %288 = vmatpush2.msra.mxu0 0.0
    %289 = vmatprep.subr.mxu0 0.0
    %290 = vmatpush2.msra.mxu0 0.0
    %291 = vmatprep.subr.mxu0 0.0
    %292 = vmatpush2.msra.mxu0 0.0
    %293 = vmatprep.subr.mxu0 0.0
    %294 = vmatpush2.msra.mxu0 0.0
    %295 = vmatprep.subr.mxu0 0.0
    %296 = vmatpush2.msra.mxu0 0.0
    %297 = vmatprep.mubr.f32.mxu0 0.0
    %298 = vmatmul.mubr.f32.gmra.mxu0 %v231
    %v299 = vpop.f32.mrf.mxu0
    %v300 = vadd.f32 %v229, %v299
    %v301 = vpop.f32.mrf.mxu0
    %302 = vdwg.mxu0
    %v303 = vmul.f32 %v300, %v300
    %v304 = vsel %vm73, %v303, 0.0
    %305 = vadd.xlane.f32.xlu0 %v304
    %v306 = vpop.xlane.xlu0 %305
    %v307 = vmax.f32 %v306, 1e-24
    %v308 = vrsqrt.pop %v307
    %v309 = vmul.f32 %v300, %v308
    %v310 = vlaneseq
    %v311 = vshrl.u32 %v310, 7
    %v312 = vsub.s32 0, %v311
    %v313 = vrot.slane %v63, %v312
    %v314 = vmul.f32 %v309, %v313
    %v315 = vsel %vm73, %v314, 0.0
    %316 = vadd.xlane.f32.xlu0 %v315
    %v317 = vpop.xlane.xlu0 %316
    %v318 = vstv %s67
    %v319 = vadd.f32 %v317, %v318
    %v320 = vlaneseq
    %v321 = vshrl.u32 %v320, 7
    %v322 = vsub.s32 0, %v321
    %v323 = vrot.slane %v64, %v322
    %vm324 = vcmask 523264
    %v326 = vsel %vm324, %v31, 0
    %328 = vmatprep.subr.mxu0 0.0
    %329 = vmatpush1.msra.mxu0 0.0
    %330 = vmatprep.subr.mxu0 0.0
    %331 = vmatpush1.msra.mxu0 0.0
    %332 = vmatprep.subr.mxu0 0.0
    %333 = vmatpush1.msra.mxu0 0.0
    %334 = vmatprep.subr.mxu0 0.0
    %335 = vmatpush1.msra.mxu0 0.0
    %336 = vmatprep.subr.mxu0 0.0
    %337 = vmatpush1.msra.mxu0 0.0
    %338 = vmatprep.subr.mxu0 0.0
    %339 = vmatpush1.msra.mxu0 0.0
    %340 = vmatprep.subr.mxu0 0.0
    %341 = vmatpush1.msra.mxu0 0.0
    %342 = vmatprep.subr.mxu0 0.0
    %343 = vmatpush1.msra.mxu0 0.0
    %344 = vmatprep.subr.mxu0 0.0
    %345 = vmatpush1.msra.mxu0 %v51
    %346 = vmatprep.subr.mxu0 0.0
    %347 = vmatpush1.msra.mxu0 %v50
    %348 = vmatprep.subr.mxu0 0.0
    %349 = vmatpush1.msra.mxu0 %v49
    %350 = vmatprep.subr.mxu0 0.0
    %351 = vmatpush1.msra.mxu0 %v48
    %352 = vmatprep.subr.mxu0 0.0
    %353 = vmatpush1.msra.mxu0 %v47
    %354 = vmatprep.subr.mxu0 0.0
    %355 = vmatpush1.msra.mxu0 %v46
    %356 = vmatprep.subr.mxu0 0.0
    %357 = vmatpush1.msra.mxu0 %v45
    %358 = vmatprep.subr.mxu0 0.0
    %359 = vmatpush1.msra.mxu0 %v44
    %360 = vmatprep.subr.mxu0 0.0
    %361 = vmatpush2.msra.mxu0 0.0
    %362 = vmatprep.subr.mxu0 0.0
    %363 = vmatpush2.msra.mxu0 0.0
    %364 = vmatprep.subr.mxu0 0.0
    %365 = vmatpush2.msra.mxu0 0.0
    %366 = vmatprep.subr.mxu0 0.0
    %367 = vmatpush2.msra.mxu0 0.0
    %368 = vmatprep.subr.mxu0 0.0
    %369 = vmatpush2.msra.mxu0 0.0
    %370 = vmatprep.subr.mxu0 0.0
    %371 = vmatpush2.msra.mxu0 0.0
    %372 = vmatprep.subr.mxu0 0.0
    %373 = vmatpush2.msra.mxu0 0.0
    %374 = vmatprep.subr.mxu0 0.0
    %375 = vmatpush2.msra.mxu0 0.0
    %376 = vmatprep.subr.mxu0 0.0
    %377 = vmatpush2.msra.mxu0 0.0
    %378 = vmatprep.subr.mxu0 0.0
    %379 = vmatpush2.msra.mxu0 0.0
    %380 = vmatprep.subr.mxu0 0.0
    %381 = vmatpush2.msra.mxu0 0.0
    %382 = vmatprep.subr.mxu0 0.0
    %383 = vmatpush2.msra.mxu0 0.0
    %384 = vmatprep.subr.mxu0 0.0
    %385 = vmatpush2.msra.mxu0 0.0
    %386 = vmatprep.subr.mxu0 0.0
    %387 = vmatpush2.msra.mxu0 0.0
    %388 = vmatprep.subr.mxu0 0.0
    %389 = vmatpush2.msra.mxu0 0.0
    %390 = vmatprep.subr.mxu0 0.0
    %391 = vmatpush2.msra.mxu0 0.0
    %392 = vmatprep.mubr.f32.mxu0 0.0
    %393 = vmatmul.mubr.f32.gmra.mxu0 %v326
    %v394 = vpop.f32.mrf.mxu0
    %v395 = vadd.f32 %v323, %v394
    %v396 = vpop.f32.mrf.mxu0
    %397 = vdwg.mxu0
    %v398 = vmax.f32 %v395, 0.0
    %v399 = vmul.f32 %v398, %v398
    %v400 = vsel %vm324, %v399, 0.0
    %401 = vadd.xlane.f32.xlu0 %v400
    %v402 = vpop.xlane.xlu0 %401
    %v403 = vmax.f32 %v402, 1e-24
    %v404 = vrsqrt.pop %v403
    %v405 = vmul.f32 %v398, %v404
    %v406 = vxor.u32 %v319, 2147483648
    %v407 = vmul.f32 %v406, 1.442695
    %v408 = vpow.pop %v407
    %v409 = vadd.f32 %v408, 1.0
    %v410 = vrcp.pop %v409
    %v411 = vmul.f32 1.0, %v410
    %v412 = vmul.f32 %v411, %v405
    %v413 = vlaneseq
    %v414 = vshrl.u32 %v413, 7
    %v415 = vsub.s32 0, %v414
    %v416 = vrot.slane %v65, %v415
    %v418 = vsel %vm324, %v412, 0
    %420 = vmatprep.subr.mxu0 0.0
    %421 = vmatpush1.msra.mxu0 0.0
    %422 = vmatprep.subr.mxu0 0.0
    %423 = vmatpush1.msra.mxu0 0.0
    %424 = vmatprep.subr.mxu0 0.0
    %425 = vmatpush1.msra.mxu0 0.0
    %426 = vmatprep.subr.mxu0 0.0
    %427 = vmatpush1.msra.mxu0 0.0
    %428 = vmatprep.subr.mxu0 0.0
    %429 = vmatpush1.msra.mxu0 0.0
    %430 = vmatprep.subr.mxu0 0.0
    %431 = vmatpush1.msra.mxu0 0.0
    %432 = vmatprep.subr.mxu0 0.0
    %433 = vmatpush1.msra.mxu0 0.0
    %434 = vmatprep.subr.mxu0 0.0
    %435 = vmatpush1.msra.mxu0 0.0
    %436 = vmatprep.subr.mxu0 0.0
    %437 = vmatpush1.msra.mxu0 %v59
    %438 = vmatprep.subr.mxu0 0.0
    %439 = vmatpush1.msra.mxu0 %v58
    %440 = vmatprep.subr.mxu0 0.0
    %441 = vmatpush1.msra.mxu0 %v57
    %442 = vmatprep.subr.mxu0 0.0
    %443 = vmatpush1.msra.mxu0 %v56
    %444 = vmatprep.subr.mxu0 0.0
    %445 = vmatpush1.msra.mxu0 %v55
    %446 = vmatprep.subr.mxu0 0.0
    %447 = vmatpush1.msra.mxu0 %v54
    %448 = vmatprep.subr.mxu0 0.0
    %449 = vmatpush1.msra.mxu0 %v53
    %450 = vmatprep.subr.mxu0 0.0
    %451 = vmatpush1.msra.mxu0 %v52
    %452 = vmatprep.subr.mxu0 0.0
    %453 = vmatpush2.msra.mxu0 0.0
    %454 = vmatprep.subr.mxu0 0.0
    %455 = vmatpush2.msra.mxu0 0.0
    %456 = vmatprep.subr.mxu0 0.0
    %457 = vmatpush2.msra.mxu0 0.0
    %458 = vmatprep.subr.mxu0 0.0
    %459 = vmatpush2.msra.mxu0 0.0
    %460 = vmatprep.subr.mxu0 0.0
    %461 = vmatpush2.msra.mxu0 0.0
    %462 = vmatprep.subr.mxu0 0.0
    %463 = vmatpush2.msra.mxu0 0.0
    %464 = vmatprep.subr.mxu0 0.0
    %465 = vmatpush2.msra.mxu0 0.0
    %466 = vmatprep.subr.mxu0 0.0
    %467 = vmatpush2.msra.mxu0 0.0
    %468 = vmatprep.subr.mxu0 0.0
    %469 = vmatpush2.msra.mxu0 0.0
    %470 = vmatprep.subr.mxu0 0.0
    %471 = vmatpush2.msra.mxu0 0.0
    %472 = vmatprep.subr.mxu0 0.0
    %473 = vmatpush2.msra.mxu0 0.0
    %474 = vmatprep.subr.mxu0 0.0
    %475 = vmatpush2.msra.mxu0 0.0
    %476 = vmatprep.subr.mxu0 0.0
    %477 = vmatpush2.msra.mxu0 0.0
    %478 = vmatprep.subr.mxu0 0.0
    %479 = vmatpush2.msra.mxu0 0.0
    %480 = vmatprep.subr.mxu0 0.0
    %481 = vmatpush2.msra.mxu0 0.0
    %482 = vmatprep.subr.mxu0 0.0
    %483 = vmatpush2.msra.mxu0 0.0
    %484 = vmatprep.mubr.f32.mxu0 0.0
    %485 = vmatmul.mubr.f32.gmra.mxu0 %v418
    %v486 = vpop.f32.mrf.mxu0
    %v487 = vadd.f32 %v416, %v486
    %v488 = vpop.f32.mrf.mxu0
    %489 = vdwg.mxu0
    %v490 = vmax.f32 %v487, 0.0
    %v491 = vlaneseq
    %v492 = vshrl.u32 %v491, 7
    %v493 = vsub.s32 0, %v492
    %v494 = vrot.slane %v66, %v493
    %v495 = vmul.f32 %v490, %v494
    %v496 = vsel %vm324, %v495, 0.0
    %497 = vadd.xlane.f32.xlu0 %v496
    %v498 = vpop.xlane.xlu0 %497
    %v499 = vstv %s68
    %v500 = vadd.f32 %v498, %v499
    %vm501 = vcmask 7168
    %v502 = vsel %vm501, %v500, %v319
    %vm503 = vcmask 15360
    %504 = vst.msk [vmem:[%s4] sm:$0xff] %vm503, %v502
    // Predicated region
    $region22: #{tpu_custom_call.1} parent=1 // pred_check
      _
    $region23: #{tpu_custom_call.1} parent=1 // pred_check_branch
      %506 = sbr.rel (0) target = $region25
    $region24: #{tpu_custom_call.1} parent=1 // pred_region
      _
    $region25: #{tpu_custom_call.1} parent=1 // pred_fallthru
      _
    // Predicated region
    $region26: #{tpu_custom_call.1} parent=1 // pred_check
      _
    $region27: #{tpu_custom_call.1} parent=1 // pred_check_branch
      %508 = sbr.rel (0) target = $region29
    $region28: #{tpu_custom_call.1} parent=1 // pred_region
      _
    $region29: #{tpu_custom_call.1} parent=1 // pred_fallthru
      _
    %509 = vsyncpa [#allocation3], 1

</llo_original>
